<compile_context>
chip_gen: v7x
topology: tpu7x:2x2x1
jax: 0.10.0
libtpu: 0.0.40
codegen_flags: <defaults>
</compile_context>

<pallas_src>
import jax
import jax.numpy as jnp
from jax import lax
from jax.experimental import pallas as pl
from jax.experimental.pallas import tpu as pltpu


# ----------------------------------------------------------------------------
# Kernel: one batch element per grid step.
#   out[b] = (D[b] @ U) @ H[b]^T   (transpose expressed via dot_general dims)
# ----------------------------------------------------------------------------
def _bilinear_kernel(d_ref, u_ref, h_ref, out_ref):
    du = jnp.dot(d_ref[0], u_ref[...], preferred_element_type=jnp.float32)   # (S, d)
    out_ref[0] = lax.dot_general(
        du, h_ref[0],
        dimension_numbers=(((1,), (1,)), ((), ())),   # contract d-with-d -> (S, S)
        preferred_element_type=jnp.float32,
    )


def bilinear(D, U, H):
    """D: [B, S, d], U: [d, d], H: [B, S, d]  ->  scores [B, S, S] (float32)."""
    B, S, d = D.shape
    assert U.shape == (d, d), U.shape
    assert H.shape == (B, S, d), H.shape

    flops = 2 * B * (S * d * d + S * S * d)
    bytes_accessed = 4 * (D.size + H.size + B * U.size + B * S * S)

    return pl.pallas_call(
        _bilinear_kernel,
        out_shape=jax.ShapeDtypeStruct((B, S, S), jnp.float32),
        grid_spec=pltpu.PrefetchScalarGridSpec(
            num_scalar_prefetch=0,
            grid=(B,),
            in_specs=[
                pl.BlockSpec((1, S, d), lambda b: (b, 0, 0)),   # D[b]
                pl.BlockSpec((d, d), lambda b: (0, 0)),         # U (resident)
                pl.BlockSpec((1, S, d), lambda b: (b, 0, 0)),   # H[b]
            ],
            out_specs=pl.BlockSpec((1, S, S), lambda b: (b, 0, 0)),
        ),
        compiler_params=pltpu.CompilerParams(
            dimension_semantics=("parallel",),
        ),
        cost_estimate=pl.CostEstimate(
            flops=flops, transcendentals=0, bytes_accessed=bytes_accessed),
    )(D, U, H)


# ----------------------------------------------------------------------------
# Demo / self-check
# ----------------------------------------------------------------------------
if __name__ == "__main__":
    # Small but lane-aligned shapes: batch=2, seq=128, d=128 (multiples of (8,128)).
    B, S, d = 2, 128, 128

    key = jax.random.PRNGKey(0)
    k_d, k_h, k_u = jax.random.split(key, 3)

    D = jax.random.normal(k_d, (B, S, d), dtype=jnp.float32)
    H = jax.random.normal(k_h, (B, S, d), dtype=jnp.float32)
    # xavier_normal_ on a (d, d) parameter: std = sqrt(2 / (d + d))
    xav_std = (2.0 / (d + d)) ** 0.5
    U = (xav_std * jax.random.normal(k_u, (d, d))).astype(jnp.float32)

    out = jax.jit(bilinear)(D, U, H)
    out = jax.block_until_ready(out)

    assert out.shape == (B, S, S), out.shape
    assert bool(jnp.all(jnp.isfinite(out)))

    # Reference check against the einsum from the PyTorch spec.
    ref = jnp.einsum("bxi,ij,byj->bxy", D, U, H, precision=lax.Precision.HIGHEST)
    max_err = float(jnp.max(jnp.abs(out - ref)))
    scale = float(jnp.max(jnp.abs(ref)))
    assert max_err <= 2e-2 * scale + 1e-3, (max_err, scale)

    print("KERNEL_OK")
</pallas_src>

<mosaic_0001>
module attributes {stable_mosaic.version = 11 : i64} {
  func.func @_bilinear_kernel(%arg0: i32, %arg1: memref<1x128x128xf32, #tpu.memory_space<vmem>>, %arg2: memref<128x128xf32, #tpu.memory_space<vmem>>, %arg3: memref<1x128x128xf32, #tpu.memory_space<vmem>>, %arg4: memref<1x128x128xf32, #tpu.memory_space<vmem>>) attributes {dimension_semantics = [#tpu.dimension_semantics<parallel>], iteration_bounds = array<i64: 2>, scalar_prefetch = 0 : i64, scratch_operands = 0 : i64, tpu.core_type = #tpu.core_type<tc>, window_params = [{transform_indices = @transform_0, window_bounds = array<i64: 1, 128, 128>}, {pipeline_mode = #tpu.pipeline_mode<synchronous>, transform_indices = @transform_1, window_bounds = array<i64: 128, 128>}, {transform_indices = @transform_2, window_bounds = array<i64: 1, 128, 128>}, {transform_indices = @transform_3, window_bounds = array<i64: 1, 128, 128>}]} {
    %c0 = arith.constant 0 : index
    %c0_0 = arith.constant 0 : index
    %c0_1 = arith.constant 0 : index
    %0 = vector.load %arg1[%c0, %c0_0, %c0_1] : memref<1x128x128xf32, #tpu.memory_space<vmem>>, vector<1x128x128xf32>
    %1 = vector.shape_cast %0 : vector<1x128x128xf32> to vector<128x128xf32>
    %c0_2 = arith.constant 0 : index
    %c0_3 = arith.constant 0 : index
    %2 = vector.load %arg2[%c0_2, %c0_3] : memref<128x128xf32, #tpu.memory_space<vmem>>, vector<128x128xf32>
    %cst = arith.constant dense<0.000000e+00> : vector<128x128xf32>
    %3 = tpu.matmul %1, %2, %cst {dimension_numbers = #tpu.dot_dimension_numbers<[1], [0], [0], [1], [0, 0, 1, 1], [], []>} : vector<128x128xf32>, vector<128x128xf32>, vector<128x128xf32> -> vector<128x128xf32>
    %c0_4 = arith.constant 0 : index
    %c0_5 = arith.constant 0 : index
    %c0_6 = arith.constant 0 : index
    %4 = vector.load %arg3[%c0_4, %c0_5, %c0_6] : memref<1x128x128xf32, #tpu.memory_space<vmem>>, vector<1x128x128xf32>
    %5 = vector.shape_cast %4 : vector<1x128x128xf32> to vector<128x128xf32>
    %cst_7 = arith.constant dense<0.000000e+00> : vector<128x128xf32>
    %6 = tpu.matmul %3, %5, %cst_7 {dimension_numbers = #tpu.dot_dimension_numbers<[1], [1], [0], [0], [0, 0, 1, 0], [], []>} : vector<128x128xf32>, vector<128x128xf32>, vector<128x128xf32> -> vector<128x128xf32>
    %c0_8 = arith.constant 0 : index
    %c0_9 = arith.constant 0 : index
    %c0_10 = arith.constant 0 : index
    %7 = vector.load %arg4[%c0_8, %c0_9, %c0_10] : memref<1x128x128xf32, #tpu.memory_space<vmem>>, vector<1x128x128xf32>
    %8 = vector.shape_cast %7 : vector<1x128x128xf32> to vector<128x128xf32>
    %9 = vector.shape_cast %6 : vector<128x128xf32> to vector<1x128x128xf32>
    tpu.vector_store %arg4[%c0_8, %c0_9, %c0_10], %9 {strides = array<i32>} : memref<1x128x128xf32, #tpu.memory_space<vmem>>, vector<1x128x128xf32>,
    return
  }
  func.func @transform_0(%arg0: i32) -> (i32, i32, i32) {
    %c0_i32 = arith.constant 0 : i32
    %c0_i32_0 = arith.constant 0 : i32
    %c0_i32_1 = arith.constant 0 : i32
    return %arg0, %c0_i32, %c0_i32_0 : i32, i32, i32
  }
  func.func @transform_1(%arg0: i32) -> (i32, i32) {
    %c0_i32 = arith.constant 0 : i32
    %c0_i32_0 = arith.constant 0 : i32
    %c0_i32_1 = arith.constant 0 : i32
    return %c0_i32, %c0_i32_0 : i32, i32
  }
  func.func @transform_2(%arg0: i32) -> (i32, i32, i32) {
    %c0_i32 = arith.constant 0 : i32
    %c0_i32_0 = arith.constant 0 : i32
    %c0_i32_1 = arith.constant 0 : i32
    return %arg0, %c0_i32, %c0_i32_0 : i32, i32, i32
  }
  func.func @transform_3(%arg0: i32) -> (i32, i32, i32) {
    %c0_i32 = arith.constant 0 : i32
    %c0_i32_0 = arith.constant 0 : i32
    %c0_i32_1 = arith.constant 0 : i32
    return %arg0, %c0_i32, %c0_i32_0 : i32, i32, i32
  }
}

</mosaic_0001>

<llo_original>
// kernel: bilinear.1
$region0: #{bilinear.1}
  #allocation0 [shape = 'u32[]', space=smem, size = 0x4, offset = 0x4, fixed_abs, tag = 'smem constant byte address 0x4 - core index']
  #allocation1 [shape = 'u32[144,128]{1,0:T(1,128)}', space=vmem, size = 0x12000, scoped, tag = 'internal scratch']
  %s0 = inlined_call_operand.hbm [shape: f32[2,128,128], index: 0, kind: input, shape index: {}]
  %s1 = inlined_call_operand.hbm [shape: f32[128,128], index: 1, kind: input, shape index: {}]
  %s2 = inlined_call_operand.hbm [shape: f32[2,128,128], index: 2, kind: input, shape index: {}]
  %s3 = inlined_call_operand.hbm [shape: f32[2,128,128], index: 3, kind: output, shape index: {}]
  %s4 = sld [smem:[#allocation0]]
  $region57: #{bilinear.1} parent=0
    _
  %s6 = ssub.s32 1, %s4
  %s7 = scalar_select 0, %s6, %s4
  $region1: #{bilinear.1} parent=0
    #allocation2 [shape = 'u8[131072]{0}', space=vmem, size = 0x20000, scoped, tag = 'input window, operand 0']
    #allocation3 [shape = 's32[2]{0}', space=sflag, size = 0x8, scoped, tag = 'scoped memory for bilinear.1']
    #allocation4 [shape = 's32[2]{0}', space=sflag, size = 0x8, scoped, tag = 'scoped memory for bilinear.1']
    #allocation5 [shape = 'u8[65536]{0}', space=vmem, size = 0x10000, scoped, tag = 'input window, operand 1, single buffered']
    #allocation6 [shape = 's32[1]{0}', space=sflag, size = 0x4, scoped, tag = 'scoped memory for bilinear.1']
    #allocation7 [shape = 'u8[131072]{0}', space=vmem, size = 0x20000, scoped, tag = 'input window, operand 2']
    #allocation8 [shape = 'u8[131072]{0}', space=vmem, size = 0x20000, scoped, tag = 'output window, operand 0']
    %8 = vsyncpa [#allocation3], 0
    %s9 = scalar_lea.sflag [#allocation3], 1
    %10 = vsyncpa %s9, 0
    %11 = vsyncpa [#allocation6], 0
    %12 = vsyncpa [#allocation4], 0
    %s13 = scalar_lea.sflag [#allocation4], 1
    %14 = vsyncpa %s13, 0
    loop: start=0, step=1, limit=4
    $region2: #{bilinear.1} parent=1 // loop_pre_header
      _
    $region3: #{bilinear.1} parent=1 // loop_header
      %s16 = sphi 0, %s20
      %p17 = scmp.ge.s32.totalorder %s16, 4
      %s26 = sphi 0, %s28
      %s29 = sphi 0, %s26
      %s30 = sphi 0, %s29
      %s46 = sphi 0, %s30
      %s50 = sphi 0, %s50
      %s52 = sphi 0, %s50
      %s53 = sphi 0, %s52
      %s67 = sphi 0, %s53
      %s73 = sphi 0, %s75
      %s76 = sphi 0, %s73
      %s77 = sphi 0, %s76
      %s93 = sphi 0, %s77
      %s99 = sphi 0, %s101
      %s102 = sphi 0, %s99
      %s103 = sphi 0, %s102
      %s119 = sphi 0, %s103
    $region4: #{bilinear.1} parent=1 // loop_header_branch
      %19 = sbr.rel (%p17) target = $region8
    $region5: #{bilinear.1} parent=1 // loop_body
      %s21 = ssub.s32 %s16, 1
      %s22 = ssub.s32 %s16, 2
      %s23 = sadd.s32 %s16, 1
      %s24 = ssub.s32 %s16, %s23
      %p25 = scmp.eq.s32.totalorder %s24, 0
      %s27 = sadd.s32 %s26, 1
      %s28 = scalar_select %p25, %s26, %s27
      %p31 = pneg %p25
      %p32 = scmp.eq.s32.totalorder %s16, 1
      %p33 = por %p31, %p32
      %p34 = scmp.ne.s32.totalorder %s26, %s29
      %p35 = scmp.eq.s32.totalorder %s16, 0
      %p36 = por %p34, %p35
      %p37 = scmp.ne.s32.totalorder %s26, %s29
      %p38 = scmp.eq.s32.totalorder %s21, 1
      %p39 = por %p37, %p38
      %p40 = scmp.ne.s32.totalorder %s29, %s30
      %p41 = scmp.eq.s32.totalorder %s21, 0
      %p42 = por %p40, %p41
      %p43 = scmp.ne.s32.totalorder %s29, %s30
      %p44 = scmp.eq.s32.totalorder %s22, 1
      %p45 = por %p43, %p44
      %p47 = scmp.ne.s32.totalorder %s30, %s46
      %p48 = scmp.eq.s32.totalorder %s22, 0
      %p49 = por %p47, %p48
      %s51 = sadd.s32 %s50, 1
      %p54 = scmp.eq.s32.totalorder %s16, 1
      %p55 = scmp.ne.s32.totalorder %s50, %s52
      %p56 = scmp.eq.s32.totalorder %s16, 0
      %p57 = por %p55, %p56
      %p58 = scmp.ne.s32.totalorder %s50, %s52
      %p59 = scmp.eq.s32.totalorder %s21, 1
      %p60 = por %p58, %p59
      %p61 = scmp.ne.s32.totalorder %s52, %s53
      %p62 = scmp.eq.s32.totalorder %s21, 0
      %p63 = por %p61, %p62
      %p64 = scmp.ne.s32.totalorder %s52, %s53
      %p65 = scmp.eq.s32.totalorder %s22, 1
      %p66 = por %p64, %p65
      %p68 = scmp.ne.s32.totalorder %s53, %s67
      %p69 = scmp.eq.s32.totalorder %s22, 0
      %p70 = por %p68, %p69
      %s71 = ssub.s32 %s16, %s23
      %p72 = scmp.eq.s32.totalorder %s71, 0
      %s74 = sadd.s32 %s73, 1
      %s75 = scalar_select %p72, %s73, %s74
      %p78 = pneg %p72
      %p79 = scmp.eq.s32.totalorder %s16, 1
      %p80 = por %p78, %p79
      %p81 = scmp.ne.s32.totalorder %s73, %s76
      %p82 = scmp.eq.s32.totalorder %s16, 0
      %p83 = por %p81, %p82
      %p84 = scmp.ne.s32.totalorder %s73, %s76
      %p85 = scmp.eq.s32.totalorder %s21, 1
      %p86 = por %p84, %p85
      %p87 = scmp.ne.s32.totalorder %s76, %s77
      %p88 = scmp.eq.s32.totalorder %s21, 0
      %p89 = por %p87, %p88
      %p90 = scmp.ne.s32.totalorder %s76, %s77
      %p91 = scmp.eq.s32.totalorder %s22, 1
      %p92 = por %p90, %p91
      %p94 = scmp.ne.s32.totalorder %s77, %s93
      %p95 = scmp.eq.s32.totalorder %s22, 0
      %p96 = por %p94, %p95
      %s97 = ssub.s32 %s16, %s23
      %p98 = scmp.eq.s32.totalorder %s97, 0
      %s100 = sadd.s32 %s99, 1
      %s101 = scalar_select %p98, %s99, %s100
      %p104 = pneg %p98
      %p105 = scmp.eq.s32.totalorder %s16, 1
      %p106 = por %p104, %p105
      %p107 = scmp.ne.s32.totalorder %s99, %s102
      %p108 = scmp.eq.s32.totalorder %s16, 0
      %p109 = por %p107, %p108
      %p110 = scmp.ne.s32.totalorder %s99, %s102
      %p111 = scmp.eq.s32.totalorder %s21, 1
      %p112 = por %p110, %p111
      %p113 = scmp.ne.s32.totalorder %s102, %s103
      %p114 = scmp.eq.s32.totalorder %s21, 0
      %p115 = por %p113, %p114
      %p116 = scmp.ne.s32.totalorder %s102, %s103
      %p117 = scmp.eq.s32.totalorder %s22, 1
      %p118 = por %p116, %p117
      %p120 = scmp.ne.s32.totalorder %s103, %s119
      %p121 = scmp.eq.s32.totalorder %s22, 0
      %p122 = por %p120, %p121
      %p123 = scmp.le.s32.totalorder 1, %s16
      %p124 = scmp.lt.s32.totalorder %s16, 3
      %p125 = pnand %p123, %p124
      %p126 = pneg %p125
      // Predicated region
      $region9: #{bilinear.1} parent=5 // pred_check
        _
      $region10: #{bilinear.1} parent=5 // pred_check_branch
        %128 = sbr.rel (%p125) target = $region12
      $region11: #{bilinear.1} parent=5 // pred_region
        %s129 = ssub.s32 %s16, 1
        // Predicated region
        $region13: #{bilinear.1} parent=11 // pred_check
          %p130 = pneg %p63
        $region14: #{bilinear.1} parent=11 // pred_check_branch
          %132 = sbr.rel (%p130) target = $region16
        $region15: #{bilinear.1} parent=11 // pred_region
          %s134 = ssub.s32 2048, 2048
          %135 = vsyncadd [#allocation6], %s134
          %s136 = sshll.u32 [#allocation5], 4
          %s137 = int_to_ptr.vmem [resolvable:$true] %s136
          %142 = dma.hbm_to_vmem [thread:$0]  %s1, 2048, %s137, [#allocation6], 128, 128, 8
        $region16: #{bilinear.1} parent=11 // pred_fallthru
          _
      $region12: #{bilinear.1} parent=5 // pred_fallthru
        _
      %p143 = scmp.lt.s32.totalorder %s16, 2
      // Predicated region
      $region17: #{bilinear.1} parent=5 // pred_check
        %p144 = pneg %p143
      $region18: #{bilinear.1} parent=5 // pred_check_branch
        %146 = sbr.rel (%p144) target = $region20
      $region19: #{bilinear.1} parent=5 // pred_region
        // Predicated region
        $region21: #{bilinear.1} parent=19 // pred_check
          %p147 = pneg %p36
        $region22: #{bilinear.1} parent=19 // pred_check_branch
          %149 = sbr.rel (%p147) target = $region24
        $region23: #{bilinear.1} parent=19 // pred_region
          %s150 = sand.u32 %s16, 1
          %s151 = scalar_lea.sflag [#allocation3], %s150
          %s152 = sand.u32 %s26, 1
          %s153 = smul.addr %s152, 128
          %s154 = scalar_lea.vmem [#allocation2], %s153
          %s156 = ssub.s32 2048, 2048
          %157 = vsyncadd %s151, %s156
          %s158 = smul.addr %s16, 16
          %s159 = smul.addr %s158, 128
          %s160 = scalar_lea.hbm %s0, %s159
          %s161 = sshll.u32 %s154, 4
          %s162 = int_to_ptr.vmem [resolvable:$true] %s161
          %167 = dma.hbm_to_vmem [thread:$0]  %s160, 2048, %s162, %s151, 128, 128, 8
        $region24: #{bilinear.1} parent=19 // pred_fallthru
          _
        // Predicated region
        $region25: #{bilinear.1} parent=19 // pred_check
          %p168 = pneg %p83
        $region26: #{bilinear.1} parent=19 // pred_check_branch
          %170 = sbr.rel (%p168) target = $region28
        $region27: #{bilinear.1} parent=19 // pred_region
          %s171 = sand.u32 %s16, 1
          %s172 = scalar_lea.sflag [#allocation3], %s171
          %s173 = sand.u32 %s73, 1
          %s174 = smul.addr %s173, 128
          %s175 = scalar_lea.vmem [#allocation7], %s174
          %s177 = ssub.s32 2048, 2048
          %178 = vsyncadd %s172, %s177
          %s179 = smul.addr %s16, 16
          %s180 = smul.addr %s179, 128
          %s181 = scalar_lea.hbm %s2, %s180
          %s182 = sshll.u32 %s175, 4
          %s183 = int_to_ptr.vmem [resolvable:$true] %s182
          %188 = dma.hbm_to_vmem [thread:$0]  %s181, 2048, %s183, %s172, 128, 128, 8
        $region28: #{bilinear.1} parent=19 // pred_fallthru
          _
      $region20: #{bilinear.1} parent=5 // pred_fallthru
        _
      %p189 = scmp.le.s32.totalorder 1, %s16
      %p190 = scmp.lt.s32.totalorder %s16, 3
      %p191 = pnand %p189, %p190
      %p192 = pneg %p191
      // Predicated region
      $region29: #{bilinear.1} parent=5 // pred_check
        _
      $region30: #{bilinear.1} parent=5 // pred_check_branch
        %194 = sbr.rel (%p191) target = $region32
      $region31: #{bilinear.1} parent=5 // pred_region
        %s195 = ssub.s32 %s16, 1
        %s196 = sand.u32 %s21, 1
        %s197 = scalar_lea.sflag [#allocation3], %s196
        %s198 = sand.u32 %s29, 1
        %s199 = smul.addr %s198, 128
        %s200 = scalar_lea.vmem [#allocation2], %s199
        // Predicated region
        $region33: #{bilinear.1} parent=31 // pred_check
          %p201 = pneg %p42
        $region34: #{bilinear.1} parent=31 // pred_check_branch
          %203 = sbr.rel (%p201) target = $region36
        $region35: #{bilinear.1} parent=31 // pred_region
          %204 = dma.done %s197, 2048
        $region36: #{bilinear.1} parent=31 // pred_fallthru
          _
        // Predicated region
        $region37: #{bilinear.1} parent=31 // pred_check
          %p205 = pneg %p63
        $region38: #{bilinear.1} parent=31 // pred_check_branch
          %207 = sbr.rel (%p205) target = $region40
        $region39: #{bilinear.1} parent=31 // pred_region
          %208 = dma.done [#allocation6], 2048
        $region40: #{bilinear.1} parent=31 // pred_fallthru
          _
        %s209 = sand.u32 %s21, 1
        %s210 = scalar_lea.sflag [#allocation3], %s209
        %s211 = sand.u32 %s76, 1
        %s212 = smul.addr %s211, 128
        %s213 = scalar_lea.vmem [#allocation7], %s212
        // Predicated region
        $region41: #{bilinear.1} parent=31 // pred_check
          %p214 = pneg %p89
        $region42: #{bilinear.1} parent=31 // pred_check_branch
          %216 = sbr.rel (%p214) target = $region44
        $region43: #{bilinear.1} parent=31 // pred_region
          %217 = dma.done %s210, 2048
        $region44: #{bilinear.1} parent=31 // pred_fallthru
          _
        %s218 = sand.u32 %s21, 1
        %s219 = scalar_lea.sflag [#allocation3], %s218
        %s220 = sand.u32 %s29, 1
        %s221 = smul.addr %s220, 128
        %s222 = scalar_lea.vmem [#allocation2], %s221
        %p223 = pneg %p42
        %p224 = pneg %p39
        %p225 = pneg %p63
        %p226 = pneg %p60
        %s227 = sand.u32 %s21, 1
        %s228 = scalar_lea.sflag [#allocation3], %s227
        %s229 = sand.u32 %s76, 1
        %s230 = smul.addr %s229, 128
        %s231 = scalar_lea.vmem [#allocation7], %s230
        %p232 = pneg %p89
        %p233 = pneg %p86
        %p234 = pneg %p115
        %p235 = pneg %p112
        %s236 = sand.u32 %s102, 1
        %s237 = scalar_lea.sflag [#allocation4], %s236
        %s238 = sand.u32 %s102, 1
        %s239 = smul.addr %s238, 128
        %s240 = scalar_lea.vmem [#allocation8], %s239
        %v241 = vld [vmem:[%s200] sm:$0xff]
        %v242 = vld [vmem:[%s200 + $0x8] sm:$0xff]
        %v243 = vld [vmem:[%s200 + $0x10] sm:$0xff]
        %v244 = vld [vmem:[%s200 + $0x18] sm:$0xff]
        %v245 = vld [vmem:[%s200 + $0x20] sm:$0xff]
        %v246 = vld [vmem:[%s200 + $0x28] sm:$0xff]
        %v247 = vld [vmem:[%s200 + $0x30] sm:$0xff]
        %v248 = vld [vmem:[%s200 + $0x38] sm:$0xff]
        %v249 = vld [vmem:[%s200 + $0x40] sm:$0xff]
        %v250 = vld [vmem:[%s200 + $0x48] sm:$0xff]
        %v251 = vld [vmem:[%s200 + $0x50] sm:$0xff]
        %v252 = vld [vmem:[%s200 + $0x58] sm:$0xff]
        %v253 = vld [vmem:[%s200 + $0x60] sm:$0xff]
        %v254 = vld [vmem:[%s200 + $0x68] sm:$0xff]
        %v255 = vld [vmem:[%s200 + $0x70] sm:$0xff]
        %v256 = vld [vmem:[%s200 + $0x78] sm:$0xff]
        %v257 = vld [vmem:[#allocation5] sm:$0xff]
        %v258 = vld [vmem:[#allocation5 + $0x8] sm:$0xff]
        %v259 = vld [vmem:[#allocation5 + $0x10] sm:$0xff]
        %v260 = vld [vmem:[#allocation5 + $0x18] sm:$0xff]
        %v261 = vld [vmem:[#allocation5 + $0x20] sm:$0xff]
        %v262 = vld [vmem:[#allocation5 + $0x28] sm:$0xff]
        %v263 = vld [vmem:[#allocation5 + $0x30] sm:$0xff]
        %v264 = vld [vmem:[#allocation5 + $0x38] sm:$0xff]
        %v265 = vld [vmem:[#allocation5 + $0x40] sm:$0xff]
        %v266 = vld [vmem:[#allocation5 + $0x48] sm:$0xff]
        %v267 = vld [vmem:[#allocation5 + $0x50] sm:$0xff]
        %v268 = vld [vmem:[#allocation5 + $0x58] sm:$0xff]
        %v269 = vld [vmem:[#allocation5 + $0x60] sm:$0xff]
        %v270 = vld [vmem:[#allocation5 + $0x68] sm:$0xff]
        %v271 = vld [vmem:[#allocation5 + $0x70] sm:$0xff]
        %v272 = vld [vmem:[#allocation5 + $0x78] sm:$0xff]
        %273 = vmatprep.subr.mxu0 0.0
        %274 = vmatpush1.msra.mxu0 %v257
        %275 = vmatprep.subr.mxu0 0.0
        %276 = vmatpush1.msra.mxu0 %v258
        %277 = vmatprep.subr.mxu0 0.0
        %278 = vmatpush1.msra.mxu0 %v259
        %279 = vmatprep.subr.mxu0 0.0
        %280 = vmatpush1.msra.mxu0 %v260
        %281 = vmatprep.subr.mxu0 0.0
        %282 = vmatpush1.msra.mxu0 %v261
        %283 = vmatprep.subr.mxu0 0.0
        %284 = vmatpush1.msra.mxu0 %v262
        %285 = vmatprep.subr.mxu0 0.0
        %286 = vmatpush1.msra.mxu0 %v263
        %287 = vmatprep.subr.mxu0 0.0
        %288 = vmatpush1.msra.mxu0 %v264
        %289 = vmatprep.subr.mxu0 0.0
        %290 = vmatpush1.msra.mxu0 %v265
        %291 = vmatprep.subr.mxu0 0.0
        %292 = vmatpush1.msra.mxu0 %v266
        %293 = vmatprep.subr.mxu0 0.0
        %294 = vmatpush1.msra.mxu0 %v267
        %295 = vmatprep.subr.mxu0 0.0
        %296 = vmatpush1.msra.mxu0 %v268
        %297 = vmatprep.subr.mxu0 0.0
        %298 = vmatpush1.msra.mxu0 %v269
        %299 = vmatprep.subr.mxu0 0.0
        %300 = vmatpush1.msra.mxu0 %v270
        %301 = vmatprep.subr.mxu0 0.0
        %302 = vmatpush1.msra.mxu0 %v271
        %303 = vmatprep.subr.mxu0 0.0
        %304 = vmatpush1.msra.mxu0 %v272
        %305 = vmatprep.subr.mxu0 0.0
        %306 = vmatpush1.msra.mxu0 0.0
        %307 = vmatprep.subr.mxu0 0.0
        %308 = vmatpush1.msra.mxu0 0.0
        %309 = vmatprep.subr.mxu0 0.0
        %310 = vmatpush1.msra.mxu0 0.0
        %311 = vmatprep.subr.mxu0 0.0
        %312 = vmatpush1.msra.mxu0 0.0
        %313 = vmatprep.subr.mxu0 0.0
        %314 = vmatpush1.msra.mxu0 0.0
        %315 = vmatprep.subr.mxu0 0.0
        %316 = vmatpush1.msra.mxu0 0.0
        %317 = vmatprep.subr.mxu0 0.0
        %318 = vmatpush1.msra.mxu0 0.0
        %319 = vmatprep.subr.mxu0 0.0
        %320 = vmatpush1.msra.mxu0 0.0
        %321 = vmatprep.subr.mxu0 0.0
        %322 = vmatpush1.msra.mxu0 0.0
        %323 = vmatprep.subr.mxu0 0.0
        %324 = vmatpush1.msra.mxu0 0.0
        %325 = vmatprep.subr.mxu0 0.0
        %326 = vmatpush1.msra.mxu0 0.0
        %327 = vmatprep.subr.mxu0 0.0
        %328 = vmatpush1.msra.mxu0 0.0
        %329 = vmatprep.subr.mxu0 0.0
        %330 = vmatpush1.msra.mxu0 0.0
        %331 = vmatprep.subr.mxu0 0.0
        %332 = vmatpush1.msra.mxu0 0.0
        %333 = vmatprep.subr.mxu0 0.0
        %334 = vmatpush1.msra.mxu0 0.0
        %335 = vmatprep.subr.mxu0 0.0
        %336 = vmatpush1.msra.mxu0 0.0
        %337 = vmatprep.mubr.f32.mxu0 0.0
        %338 = vmatmul.mubr.f32.gmra.mrb[0].mxu0 %v241
        %v339 = vpop.f32.mrb[0].mxu0
        %v340 = vadd.f32 0.0, %v339
        %v341 = vpop.f32.mrb[0].mxu0
        %342 = vmatprep.mubr.f32.mxu0 0.0
        %343 = vmatmul.mubr.f32.gmra.mrb[0].mxu0 %v242
        %v344 = vpop.f32.mrb[0].mxu0
        %v345 = vadd.f32 0.0, %v344
        %v346 = vpop.f32.mrb[0].mxu0
        %347 = vmatprep.mubr.f32.mxu0 0.0
        %348 = vmatmul.mubr.f32.gmra.mrb[0].mxu0 %v243
        %v349 = vpop.f32.mrb[0].mxu0
        %v350 = vadd.f32 0.0, %v349
        %v351 = vpop.f32.mrb[0].mxu0
        %352 = vmatprep.mubr.f32.mxu0 0.0
        %353 = vmatmul.mubr.f32.gmra.mrb[0].mxu0 %v244
        %v354 = vpop.f32.mrb[0].mxu0
        %v355 = vadd.f32 0.0, %v354
        %v356 = vpop.f32.mrb[0].mxu0
        %357 = vmatprep.mubr.f32.mxu0 0.0
        %358 = vmatmul.mubr.f32.gmra.mrb[0].mxu0 %v245
        %v359 = vpop.f32.mrb[0].mxu0
        %v360 = vadd.f32 0.0, %v359
        %v361 = vpop.f32.mrb[0].mxu0
        %362 = vmatprep.mubr.f32.mxu0 0.0
        %363 = vmatmul.mubr.f32.gmra.mrb[0].mxu0 %v246
        %v364 = vpop.f32.mrb[0].mxu0
        %v365 = vadd.f32 0.0, %v364
        %v366 = vpop.f32.mrb[0].mxu0
        %367 = vmatprep.mubr.f32.mxu0 0.0
        %368 = vmatmul.mubr.f32.gmra.mrb[0].mxu0 %v247
        %v369 = vpop.f32.mrb[0].mxu0
        %v370 = vadd.f32 0.0, %v369
        %v371 = vpop.f32.mrb[0].mxu0
        %372 = vmatprep.mubr.f32.mxu0 0.0
        %373 = vmatmul.mubr.f32.gmra.mrb[0].mxu0 %v248
        %v374 = vpop.f32.mrb[0].mxu0
        %v375 = vadd.f32 0.0, %v374
        %v376 = vpop.f32.mrb[0].mxu0
        %377 = vmatprep.mubr.f32.mxu0 0.0
        %378 = vmatmul.mubr.f32.gmra.mrb[0].mxu0 %v249
        %v379 = vpop.f32.mrb[0].mxu0
        %v380 = vadd.f32 0.0, %v379
        %v381 = vpop.f32.mrb[0].mxu0
        %382 = vmatprep.mubr.f32.mxu0 0.0
        %383 = vmatmul.mubr.f32.gmra.mrb[0].mxu0 %v250
        %v384 = vpop.f32.mrb[0].mxu0
        %v385 = vadd.f32 0.0, %v384
        %v386 = vpop.f32.mrb[0].mxu0
        %387 = vmatprep.mubr.f32.mxu0 0.0
        %388 = vmatmul.mubr.f32.gmra.mrb[0].mxu0 %v251
        %v389 = vpop.f32.mrb[0].mxu0
        %v390 = vadd.f32 0.0, %v389
        %v391 = vpop.f32.mrb[0].mxu0
        %392 = vmatprep.mubr.f32.mxu0 0.0
        %393 = vmatmul.mubr.f32.gmra.mrb[0].mxu0 %v252
        %v394 = vpop.f32.mrb[0].mxu0
        %v395 = vadd.f32 0.0, %v394
        %v396 = vpop.f32.mrb[0].mxu0
        %397 = vmatprep.mubr.f32.mxu0 0.0
        %398 = vmatmul.mubr.f32.gmra.mrb[0].mxu0 %v253
        %v399 = vpop.f32.mrb[0].mxu0
        %v400 = vadd.f32 0.0, %v399
        %v401 = vpop.f32.mrb[0].mxu0
        %402 = vmatprep.mubr.f32.mxu0 0.0
        %403 = vmatmul.mubr.f32.gmra.mrb[0].mxu0 %v254
        %v404 = vpop.f32.mrb[0].mxu0
        %v405 = vadd.f32 0.0, %v404
        %v406 = vpop.f32.mrb[0].mxu0
        %407 = vmatprep.mubr.f32.mxu0 0.0
        %408 = vmatmul.mubr.f32.gmra.mrb[0].mxu0 %v255
        %v409 = vpop.f32.mrb[0].mxu0
        %v410 = vadd.f32 0.0, %v409
        %v411 = vpop.f32.mrb[0].mxu0
        %412 = vmatprep.mubr.f32.mxu0 0.0
        %413 = vmatmul.mubr.f32.gmra.mrb[0].mxu0 %v256
        %v414 = vpop.f32.mrb[0].mxu0
        %v415 = vadd.f32 0.0, %v414
        %v416 = vpop.f32.mrb[0].mxu0
        %417 = vdwg.mxu0
        %v418 = vld [vmem:[%s213] sm:$0xff]
        %v419 = vld [vmem:[%s213 + $0x8] sm:$0xff]
        %v420 = vld [vmem:[%s213 + $0x10] sm:$0xff]
        %v421 = vld [vmem:[%s213 + $0x18] sm:$0xff]
        %v422 = vld [vmem:[%s213 + $0x20] sm:$0xff]
        %v423 = vld [vmem:[%s213 + $0x28] sm:$0xff]
        %v424 = vld [vmem:[%s213 + $0x30] sm:$0xff]
        %v425 = vld [vmem:[%s213 + $0x38] sm:$0xff]
        %v426 = vld [vmem:[%s213 + $0x40] sm:$0xff]
        %v427 = vld [vmem:[%s213 + $0x48] sm:$0xff]
        %v428 = vld [vmem:[%s213 + $0x50] sm:$0xff]
        %v429 = vld [vmem:[%s213 + $0x58] sm:$0xff]
        %v430 = vld [vmem:[%s213 + $0x60] sm:$0xff]
        %v431 = vld [vmem:[%s213 + $0x68] sm:$0xff]
        %v432 = vld [vmem:[%s213 + $0x70] sm:$0xff]
        %v433 = vld [vmem:[%s213 + $0x78] sm:$0xff]
        %434 = vmatprep.subr.mxu0 0.0
        %435 = vmatpush1.xpose.msra.mxu0 %v418
        %436 = vmatprep.subr.mxu0 0.0
        %437 = vmatpush1.xpose.msra.mxu0 %v419
        %438 = vmatprep.subr.mxu0 0.0
        %439 = vmatpush1.xpose.msra.mxu0 %v420
        %440 = vmatprep.subr.mxu0 0.0
        %441 = vmatpush1.xpose.msra.mxu0 %v421
        %442 = vmatprep.subr.mxu0 0.0
        %443 = vmatpush1.xpose.msra.mxu0 %v422
        %444 = vmatprep.subr.mxu0 0.0
        %445 = vmatpush1.xpose.msra.mxu0 %v423
        %446 = vmatprep.subr.mxu0 0.0
        %447 = vmatpush1.xpose.msra.mxu0 %v424
        %448 = vmatprep.subr.mxu0 0.0
        %449 = vmatpush1.xpose.msra.mxu0 %v425
        %450 = vmatprep.subr.mxu0 0.0
        %451 = vmatpush1.xpose.msra.mxu0 %v426
        %452 = vmatprep.subr.mxu0 0.0
        %453 = vmatpush1.xpose.msra.mxu0 %v427
        %454 = vmatprep.subr.mxu0 0.0
        %455 = vmatpush1.xpose.msra.mxu0 %v428
        %456 = vmatprep.subr.mxu0 0.0
        %457 = vmatpush1.xpose.msra.mxu0 %v429
        %458 = vmatprep.subr.mxu0 0.0
        %459 = vmatpush1.xpose.msra.mxu0 %v430
        %460 = vmatprep.subr.mxu0 0.0
        %461 = vmatpush1.xpose.msra.mxu0 %v431
        %462 = vmatprep.subr.mxu0 0.0
        %463 = vmatpush1.xpose.msra.mxu0 %v432
        %464 = vmatprep.subr.mxu0 0.0
        %465 = vmatpush1.xpose.msra.mxu0 %v433
        %466 = vmatprep.subr.mxu0 0.0
        %467 = vmatpush1.xpose.msra.mxu0 0.0
        %468 = vmatprep.subr.mxu0 0.0
        %469 = vmatpush1.xpose.msra.mxu0 0.0
        %470 = vmatprep.subr.mxu0 0.0
        %471 = vmatpush1.xpose.msra.mxu0 0.0
        %472 = vmatprep.subr.mxu0 0.0
        %473 = vmatpush1.xpose.msra.mxu0 0.0
        %474 = vmatprep.subr.mxu0 0.0
        %475 = vmatpush1.xpose.msra.mxu0 0.0
        %476 = vmatprep.subr.mxu0 0.0
        %477 = vmatpush1.xpose.msra.mxu0 0.0
        %478 = vmatprep.subr.mxu0 0.0
        %479 = vmatpush1.xpose.msra.mxu0 0.0
        %480 = vmatprep.subr.mxu0 0.0
        %481 = vmatpush1.xpose.msra.mxu0 0.0
        %482 = vmatprep.subr.mxu0 0.0
        %483 = vmatpush1.xpose.msra.mxu0 0.0
        %484 = vmatprep.subr.mxu0 0.0
        %485 = vmatpush1.xpose.msra.mxu0 0.0
        %486 = vmatprep.subr.mxu0 0.0
        %487 = vmatpush1.xpose.msra.mxu0 0.0
        %488 = vmatprep.subr.mxu0 0.0
        %489 = vmatpush1.xpose.msra.mxu0 0.0
        %490 = vmatprep.subr.mxu0 0.0
        %491 = vmatpush1.xpose.msra.mxu0 0.0
        %492 = vmatprep.subr.mxu0 0.0
        %493 = vmatpush1.xpose.msra.mxu0 0.0
        %494 = vmatprep.subr.mxu0 0.0
        %495 = vmatpush1.xpose.msra.mxu0 0.0
        %496 = vmatprep.subr.mxu0 0.0
        %497 = vmatpush1.xpose.msra.mxu0 0.0
        %498 = vmatprep.mubr.f32.mxu0 0.0
        %499 = vmatmul.mubr.f32.gmra.mrb[0].mxu0 %v340
        %v500 = vpop.f32.mrb[0].mxu0
        %v501 = vadd.f32 0.0, %v500
        %v502 = vpop.f32.mrb[0].mxu0
        %503 = vmatprep.mubr.f32.mxu0 0.0
        %504 = vmatmul.mubr.f32.gmra.mrb[0].mxu0 %v345
        %v505 = vpop.f32.mrb[0].mxu0
        %v506 = vadd.f32 0.0, %v505
        %v507 = vpop.f32.mrb[0].mxu0
        %508 = vmatprep.mubr.f32.mxu0 0.0
        %509 = vmatmul.mubr.f32.gmra.mrb[0].mxu0 %v350
        %v510 = vpop.f32.mrb[0].mxu0
        %v511 = vadd.f32 0.0, %v510
        %v512 = vpop.f32.mrb[0].mxu0
        %513 = vmatprep.mubr.f32.mxu0 0.0
        %514 = vmatmul.mubr.f32.gmra.mrb[0].mxu0 %v355
        %v515 = vpop.f32.mrb[0].mxu0
        %v516 = vadd.f32 0.0, %v515
        %v517 = vpop.f32.mrb[0].mxu0
        %518 = vmatprep.mubr.f32.mxu0 0.0
        %519 = vmatmul.mubr.f32.gmra.mrb[0].mxu0 %v360
        %v520 = vpop.f32.mrb[0].mxu0
        %v521 = vadd.f32 0.0, %v520
        %v522 = vpop.f32.mrb[0].mxu0
        %523 = vmatprep.mubr.f32.mxu0 0.0
        %524 = vmatmul.mubr.f32.gmra.mrb[0].mxu0 %v365
        %v525 = vpop.f32.mrb[0].mxu0
        %v526 = vadd.f32 0.0, %v525
        %v527 = vpop.f32.mrb[0].mxu0
        %528 = vmatprep.mubr.f32.mxu0 0.0
        %529 = vmatmul.mubr.f32.gmra.mrb[0].mxu0 %v370
        %v530 = vpop.f32.mrb[0].mxu0
        %v531 = vadd.f32 0.0, %v530
        %v532 = vpop.f32.mrb[0].mxu0
        %533 = vmatprep.mubr.f32.mxu0 0.0
        %534 = vmatmul.mubr.f32.gmra.mrb[0].mxu0 %v375
        %v535 = vpop.f32.mrb[0].mxu0
        %v536 = vadd.f32 0.0, %v535
        %v537 = vpop.f32.mrb[0].mxu0
        %538 = vmatprep.mubr.f32.mxu0 0.0
        %539 = vmatmul.mubr.f32.gmra.mrb[0].mxu0 %v380
        %v540 = vpop.f32.mrb[0].mxu0
        %v541 = vadd.f32 0.0, %v540
        %v542 = vpop.f32.mrb[0].mxu0
        %543 = vmatprep.mubr.f32.mxu0 0.0
        %544 = vmatmul.mubr.f32.gmra.mrb[0].mxu0 %v385
        %v545 = vpop.f32.mrb[0].mxu0
        %v546 = vadd.f32 0.0, %v545
        %v547 = vpop.f32.mrb[0].mxu0
        %548 = vmatprep.mubr.f32.mxu0 0.0
        %549 = vmatmul.mubr.f32.gmra.mrb[0].mxu0 %v390
        %v550 = vpop.f32.mrb[0].mxu0
        %v551 = vadd.f32 0.0, %v550
        %v552 = vpop.f32.mrb[0].mxu0
        %553 = vmatprep.mubr.f32.mxu0 0.0
        %554 = vmatmul.mubr.f32.gmra.mrb[0].mxu0 %v395
        %v555 = vpop.f32.mrb[0].mxu0
        %v556 = vadd.f32 0.0, %v555
        %v557 = vpop.f32.mrb[0].mxu0
        %558 = vmatprep.mubr.f32.mxu0 0.0
        %559 = vmatmul.mubr.f32.gmra.mrb[0].mxu0 %v400
        %v560 = vpop.f32.mrb[0].mxu0
        %v561 = vadd.f32 0.0, %v560
        %v562 = vpop.f32.mrb[0].mxu0
        %563 = vmatprep.mubr.f32.mxu0 0.0
        %564 = vmatmul.mubr.f32.gmra.mrb[0].mxu0 %v405
        %v565 = vpop.f32.mrb[0].mxu0
        %v566 = vadd.f32 0.0, %v565
        %v567 = vpop.f32.mrb[0].mxu0
        %568 = vmatprep.mubr.f32.mxu0 0.0
        %569 = vmatmul.mubr.f32.gmra.mrb[0].mxu0 %v410
        %v570 = vpop.f32.mrb[0].mxu0
        %v571 = vadd.f32 0.0, %v570
        %v572 = vpop.f32.mrb[0].mxu0
        %573 = vmatprep.mubr.f32.mxu0 0.0
        %574 = vmatmul.mubr.f32.gmra.mrb[0].mxu0 %v415
        %v575 = vpop.f32.mrb[0].mxu0
        %v576 = vadd.f32 0.0, %v575
        %v577 = vpop.f32.mrb[0].mxu0
        %578 = vdwg.mxu0
        %579 = vst [vmem:[%s240] sm:$0xff] %v501
        %580 = vst [vmem:[%s240 + $0x8] sm:$0xff] %v506
        %581 = vst [vmem:[%s240 + $0x10] sm:$0xff] %v511
        %582 = vst [vmem:[%s240 + $0x18] sm:$0xff] %v516
        %583 = vst [vmem:[%s240 + $0x20] sm:$0xff] %v521
        %584 = vst [vmem:[%s240 + $0x28] sm:$0xff] %v526
        %585 = vst [vmem:[%s240 + $0x30] sm:$0xff] %v531
        %586 = vst [vmem:[%s240 + $0x38] sm:$0xff] %v536
        %587 = vst [vmem:[%s240 + $0x40] sm:$0xff] %v541
        %588 = vst [vmem:[%s240 + $0x48] sm:$0xff] %v546
        %589 = vst [vmem:[%s240 + $0x50] sm:$0xff] %v551
        %590 = vst [vmem:[%s240 + $0x58] sm:$0xff] %v556
        %591 = vst [vmem:[%s240 + $0x60] sm:$0xff] %v561
        %592 = vst [vmem:[%s240 + $0x68] sm:$0xff] %v566
        %593 = vst [vmem:[%s240 + $0x70] sm:$0xff] %v571
        %594 = vst [vmem:[%s240 + $0x78] sm:$0xff] %v576
        %s595 = sand.u32 %s102, 1
        %s596 = scalar_lea.sflag [#allocation4], %s595
        %s597 = sand.u32 %s102, 1
        %s598 = smul.addr %s597, 128
        %s599 = scalar_lea.vmem [#allocation8], %s598
        // Predicated region
        $region45: #{bilinear.1} parent=31 // pred_check
          %p600 = pneg %p112
        $region46: #{bilinear.1} parent=31 // pred_check_branch
          %602 = sbr.rel (%p600) target = $region48
        $region47: #{bilinear.1} parent=31 // pred_region
          %s604 = ssub.s32 2048, 2048
          %605 = vsyncadd %s596, %s604
          %s606 = smul.addr %s21, 16
          %s607 = smul.addr %s606, 128
          %s608 = scalar_lea.hbm %s3, %s607
          %s609 = sshll.u32 %s599, 4
          %s610 = int_to_ptr.vmem [resolvable:$true] %s609
          %615 = dma.vmem_to_hbm [thread:$0]  %s610, 2048, %s608, %s596, 128, 128, 8
        $region48: #{bilinear.1} parent=31 // pred_fallthru
          _
      $region32: #{bilinear.1} parent=5 // pred_fallthru
        _
      %p616 = scmp.le.s32.totalorder 2, %s16
      // Predicated region
      $region49: #{bilinear.1} parent=5 // pred_check
        %p617 = pneg %p616
      $region50: #{bilinear.1} parent=5 // pred_check_branch
        %619 = sbr.rel (%p617) target = $region52
      $region51: #{bilinear.1} parent=5 // pred_region
        %s620 = ssub.s32 %s16, 2
        // Predicated region
        $region53: #{bilinear.1} parent=51 // pred_check
          %p621 = pneg %p118
        $region54: #{bilinear.1} parent=51 // pred_check_branch
          %623 = sbr.rel (%p621) target = $region56
        $region55: #{bilinear.1} parent=51 // pred_region
          %s624 = sand.u32 %s103, 1
          %s625 = scalar_lea.sflag [#allocation4], %s624
          %s626 = sand.u32 %s103, 1
          %s627 = smul.addr %s626, 128
          %s628 = scalar_lea.vmem [#allocation8], %s627
          %629 = dma.done %s625, 2048
        $region56: #{bilinear.1} parent=51 // pred_fallthru
          _
      $region52: #{bilinear.1} parent=5 // pred_fallthru
        _
    $region6: #{bilinear.1} parent=1 // loop_footer
      %s20 = sadd.s32 1, %s16
    $region7: #{bilinear.1} parent=1 // loop_footer_branch
      %15 = sbr.rel target = $region3
    $region8: #{bilinear.1} parent=1 // loop_exit
      _
    %630 = vsyncpa [#allocation3], 1
    %s631 = scalar_lea.sflag [#allocation3], 1
    %632 = vsyncpa %s631, 1
    %633 = vsyncpa [#allocation6], 1
    %634 = vsyncpa [#allocation4], 1
    %s635 = scalar_lea.sflag [#allocation4], 1
    %636 = vsyncpa %s635, 1

</llo_original>
